<compile_context>
chip_gen: v7x
topology: tpu7x:2x2x1
jax: 0.10.0
libtpu: 0.0.40
codegen_flags: <defaults>
</compile_context>

<pallas_src>
import jax
import jax.numpy as jnp
from jax.experimental import pallas as pl
from jax.experimental.pallas import tpu as pltpu


HIDDEN = 100   # hidden_layer_2 in the PyTorch module
GP = 128       # padded lane width per gate and for the fc output


def _round_up(x: int, m: int) -> int:
    return ((x + m - 1) // m) * m


def _num_tensorcores() -> int:
    """Best-effort TensorCore count per chip (v7x has 2); conservative fallback 1."""
    try:
        info = pltpu.get_tpu_info()
        for attr in ("num_cores", "tensorcore_count", "num_tensorcores", "cores_per_chip"):
            v = getattr(info, attr, None)
            if isinstance(v, int) and v > 0:
                return v
    except Exception:
        pass
    return 1


def _choose_batch_tile(batch: int, num_cores: int) -> int:
    """Batch tile: big tiles (<=1024) amortize per-grid-step overhead (the kernel
    is overhead/store-bound, never VMEM-bound); capped so the 'parallel' batch
    axis still gives every TensorCore work; 256-row multiples when >=256 for
    the v6e/v7x MXU (128-multiples are implied, fine for v5e)."""
    tb = min(1024, _round_up(batch, 8))
    if num_cores > 1:
        tb = min(tb, max(8, _round_up(pl.cdiv(batch, num_cores), 8)))
    if tb >= 256:
        tb = _round_up(tb, 256)
    return tb


def _actor_kernel(x_ref, wg_ref, bg_ref, bhn_ref, wfc_ref, bfc_ref, out_ref):
    # Cast activations to bf16 only for the MXU; accumulate and do all
    # elementwise / transcendental math in f32.
    x = x_ref[...].astype(jnp.bfloat16)                               # (TB, S)

    # One fused MXU matmul for all three gates: (TB, S) @ (S, 3*128), f32 acc.
    gates = jnp.dot(x, wg_ref[...], preferred_element_type=jnp.float32) + bg_ref[...]

    # Lane-tile-aligned slices (each gate lives at a 128-lane offset).
    r = jax.nn.sigmoid(gates[:, 0 * GP:1 * GP])                       # (TB, 128)
    one_minus_z = jax.nn.sigmoid(-gates[:, 1 * GP:2 * GP])            # 1 - sigmoid(g_z)
    n = jnp.tanh(gates[:, 2 * GP:3 * GP] + r * bhn_ref[...])
    h = one_minus_z * n                                               # (TB, 128) f32

    # fc3 + tanh (output padded to 128 lanes; zero weight cols beyond A).
    y = jnp.dot(h.astype(jnp.bfloat16), wfc_ref[...],
                preferred_element_type=jnp.float32) + bfc_ref[...]
    out_ref[...] = jnp.tanh(y).astype(out_ref.dtype)                  # bf16 store


def actor_forward(state, kparams, action_size):
    """Replicates Actor.forward. `state` is 1-D (state_size,) or (..., B, state_size)
    with all leading dims of size 1 (same constraint as the torch.reshape)."""
    if state.ndim == 1:
        x = jnp.reshape(state, (1, state.shape[-1]))
    else:
        # Raises (like torch.reshape) if leading dims are not all size 1.
        x = jnp.reshape(state, (state.shape[-2], state.shape[-1]))
    x = x.astype(jnp.float32)
    B, S = x.shape

    TB = _choose_batch_tile(B, _num_tensorcores())
    grid = (pl.cdiv(B, TB),)   # no wrapper pad: Pallas masks the ragged edge block

    w_gates, b_gates, b_hn, w_fc_p, b_fc_p = kparams

    out = pl.pallas_call(
        _actor_kernel,
        out_shape=jax.ShapeDtypeStruct((B, GP), jnp.bfloat16),
        grid=grid,
        in_specs=[
            pl.BlockSpec((TB, S), lambda i: (i, 0)),          # x (f32, cast in-kernel)
            pl.BlockSpec((S, 3 * GP), lambda i: (0, 0)),      # fused gate weights (bf16)
            pl.BlockSpec((1, 3 * GP), lambda i: (0, 0)),      # fused gate biases (f32)
            pl.BlockSpec((1, GP), lambda i: (0, 0)),          # b_hn (f32, scaled by r)
            pl.BlockSpec((GP, GP), lambda i: (0, 0)),         # fc weight (bf16, padded)
            pl.BlockSpec((1, GP), lambda i: (0, 0)),          # fc bias (f32, padded)
        ],
        out_specs=pl.BlockSpec((TB, GP), lambda i: (i, 0)),
        compiler_params=pltpu.CompilerParams(
            dimension_semantics=("parallel",),
            vmem_limit_bytes=32 * 1024 * 1024),
    )(x, w_gates, b_gates, b_hn, w_fc_p, b_fc_p)

    # Strip lane padding, back to f32; PyTorch returns (seq=1, batch, action_size).
    return out[:, :action_size].astype(jnp.float32).reshape(1, B, action_size)


def init_actor_params(key, state_size, action_size):
    """PyTorch-style GRU/Linear init: uniform(-1/sqrt(H), 1/sqrt(H)). Returns raw params."""
    H = HIDDEN
    ks = jax.random.split(key, 5)
    bound = 1.0 / jnp.sqrt(jnp.float32(H))
    w_ih = jax.random.uniform(ks[0], (3 * H, state_size), jnp.float32, -bound, bound)
    b_ih = jax.random.uniform(ks[1], (3 * H,), jnp.float32, -bound, bound)
    b_hh = jax.random.uniform(ks[2], (3 * H,), jnp.float32, -bound, bound)
    w_fc = jax.random.uniform(ks[3], (action_size, H), jnp.float32, -bound, bound)
    b_fc = jax.random.uniform(ks[4], (action_size,), jnp.float32, -bound, bound)
    return (w_ih, b_ih, b_hh, w_fc, b_fc)


def pack_kernel_params(raw, state_size, action_size):
    """Pack raw (PyTorch-layout) params into fused, lane-aligned, zero-padded
    kernel params.  Matmul weights are stored bf16; biases stay f32."""
    H = HIDDEN
    w_ih, b_ih, b_hh, w_fc, b_fc = raw

    # Fused gate weights: each gate occupies a 128-lane-aligned column block.
    w_gates = jnp.zeros((state_size, 3 * GP), jnp.float32)
    for g in range(3):
        w_gates = w_gates.at[:, g * GP:g * GP + H].set(w_ih[g * H:(g + 1) * H, :].T)
    w_gates = w_gates.astype(jnp.bfloat16)

    # Fused additive biases: r -> b_ir+b_hr, z -> b_iz+b_hz, n -> b_in.
    b_gates = jnp.zeros((1, 3 * GP), jnp.float32)
    b_gates = b_gates.at[0, 0 * GP:0 * GP + H].set(b_ih[0:H] + b_hh[0:H])
    b_gates = b_gates.at[0, 1 * GP:1 * GP + H].set(b_ih[H:2 * H] + b_hh[H:2 * H])
    b_gates = b_gates.at[0, 2 * GP:2 * GP + H].set(b_ih[2 * H:3 * H])

    # b_hn stays separate (multiplied by r inside the kernel).
    b_hn = jnp.zeros((1, GP), jnp.float32).at[0, :H].set(b_hh[2 * H:3 * H])

    # fc3, padded to (128, 128) with zero rows/cols (padded h lanes are zero too).
    w_fc_p = jnp.zeros((GP, GP), jnp.float32).at[:H, :action_size].set(w_fc.T)
    w_fc_p = w_fc_p.astype(jnp.bfloat16)
    b_fc_p = jnp.zeros((1, GP), jnp.float32).at[0, :action_size].set(b_fc)

    return (w_gates, b_gates, b_hn, w_fc_p, b_fc_p)


def _reference_forward(state, raw):
    """Pure-JAX f32 reference (same math as PyTorch, no Pallas, no padding)."""
    H = HIDDEN
    w_ih, b_ih, b_hh, w_fc, b_fc = raw
    if state.ndim == 1:
        x = state.reshape(1, -1).astype(jnp.float32)
    else:
        x = state.reshape(state.shape[-2], state.shape[-1]).astype(jnp.float32)
    r = jax.nn.sigmoid(x @ w_ih[0:H].T + b_ih[0:H] + b_hh[0:H])
    z = jax.nn.sigmoid(x @ w_ih[H:2 * H].T + b_ih[H:2 * H] + b_hh[H:2 * H])
    n = jnp.tanh(x @ w_ih[2 * H:3 * H].T + b_ih[2 * H:3 * H] + r * b_hh[2 * H:3 * H])
    h = (1.0 - z) * n
    y = jnp.tanh(h @ w_fc.T + b_fc)
    return y.reshape(1, x.shape[0], -1)


if __name__ == "__main__":
    state_size = 16
    action_size = 8
    batch = 4

    key = jax.random.PRNGKey(0)
    k_param, k_state = jax.random.split(key)

    raw_params = init_actor_params(k_param, state_size, action_size)
    kparams = pack_kernel_params(raw_params, state_size, action_size)
    state = jax.random.normal(k_state, (batch, state_size), jnp.float32)

    out = actor_forward(state, kparams, action_size)
    out = jax.block_until_ready(out)

    ref = _reference_forward(state, raw_params)
    assert out.shape == (1, batch, action_size)
    # bf16 matmul weights / bf16 output store -> loosened (but still tight) tolerance.
    assert jnp.allclose(out, ref, atol=5e-2, rtol=0.0), float(jnp.max(jnp.abs(out - ref)))

    print("KERNEL_OK")
</pallas_src>

<mosaic_0001>
module attributes {stable_mosaic.version = 11 : i64} {
  func.func @_actor_kernel(%arg0: i32, %arg1: memref<8x16xf32, #tpu.memory_space<vmem>>, %arg2: memref<16x384xbf16, #tpu.memory_space<vmem>>, %arg3: memref<1x384xf32, #tpu.memory_space<vmem>>, %arg4: memref<1x128xf32, #tpu.memory_space<vmem>>, %arg5: memref<128x128xbf16, #tpu.memory_space<vmem>>, %arg6: memref<1x128xf32, #tpu.memory_space<vmem>>, %arg7: memref<8x128xbf16, #tpu.memory_space<vmem>>) attributes {dimension_semantics = [#tpu.dimension_semantics<parallel>], iteration_bounds = array<i64: 1>, scalar_prefetch = 0 : i64, scratch_operands = 0 : i64, tpu.core_type = #tpu.core_type<tc>, window_params = [{transform_indices = @transform_0, window_bounds = array<i64: 8, 16>}, {pipeline_mode = #tpu.pipeline_mode<synchronous>, transform_indices = @transform_1, window_bounds = array<i64: 16, 384>}, {pipeline_mode = #tpu.pipeline_mode<synchronous>, transform_indices = @transform_2, window_bounds = array<i64: 1, 384>}, {pipeline_mode = #tpu.pipeline_mode<synchronous>, transform_indices = @transform_3, window_bounds = array<i64: 1, 128>}, {pipeline_mode = #tpu.pipeline_mode<synchronous>, transform_indices = @transform_4, window_bounds = array<i64: 128, 128>}, {pipeline_mode = #tpu.pipeline_mode<synchronous>, transform_indices = @transform_5, window_bounds = array<i64: 1, 128>}, {transform_indices = @transform_6, window_bounds = array<i64: 8, 128>}]} {
    %c0 = arith.constant 0 : index
    %c0_0 = arith.constant 0 : index
    %0 = vector.load %arg1[%c0, %c0_0] : memref<8x16xf32, #tpu.memory_space<vmem>>, vector<8x16xf32>
    %1 = arith.truncf %0 : vector<8x16xf32> to vector<8x16xbf16>
    %c0_1 = arith.constant 0 : index
    %c0_2 = arith.constant 0 : index
    %2 = vector.load %arg2[%c0_1, %c0_2] : memref<16x384xbf16, #tpu.memory_space<vmem>>, vector<16x384xbf16>
    %cst = arith.constant dense<0.000000e+00> : vector<8x384xf32>
    %3 = tpu.matmul %1, %2, %cst {dimension_numbers = #tpu.dot_dimension_numbers<[1], [0], [0], [1], [0, 0, 1, 1], [], []>} : vector<8x16xbf16>, vector<16x384xbf16>, vector<8x384xf32> -> vector<8x384xf32>
    %c0_3 = arith.constant 0 : index
    %c0_4 = arith.constant 0 : index
    %4 = vector.load %arg3[%c0_3, %c0_4] : memref<1x384xf32, #tpu.memory_space<vmem>>, vector<1x384xf32>
    %5 = vector.broadcast %4 : vector<1x384xf32> to vector<8x384xf32>
    %6 = arith.addf %3, %5 : vector<8x384xf32>
    %7 = vector.extract_strided_slice %6 {offsets = [0, 0], sizes = [8, 128], strides = [1, 1]} : vector<8x384xf32> to vector<8x128xf32>
    %8 = arith.negf %7 : vector<8x128xf32>
    %9 = math.exp %8 : vector<8x128xf32>
    %cst_5 = arith.constant 1.000000e+00 : f32
    %10 = vector.broadcast %cst_5 : f32 to vector<8x128xf32>
    %11 = arith.addf %10, %9 : vector<8x128xf32>
    %12 = arith.divf %10, %11 : vector<8x128xf32>
    %13 = vector.extract_strided_slice %6 {offsets = [0, 128], sizes = [8, 128], strides = [1, 1]} : vector<8x384xf32> to vector<8x128xf32>
    %cst_6 = arith.constant 0.000000e+00 : f32
    %14 = vector.broadcast %cst_6 : f32 to vector<8x128xf32>
    %15 = arith.subf %14, %13 : vector<8x128xf32>
    %16 = arith.negf %15 : vector<8x128xf32>
    %17 = math.exp %16 : vector<8x128xf32>
    %cst_7 = arith.constant 1.000000e+00 : f32
    %18 = vector.broadcast %cst_7 : f32 to vector<8x128xf32>
    %19 = arith.addf %18, %17 : vector<8x128xf32>
    %20 = arith.divf %18, %19 : vector<8x128xf32>
    %21 = vector.extract_strided_slice %6 {offsets = [0, 256], sizes = [8, 128], strides = [1, 1]} : vector<8x384xf32> to vector<8x128xf32>
    %c0_8 = arith.constant 0 : index
    %c0_9 = arith.constant 0 : index
    %22 = vector.load %arg4[%c0_8, %c0_9] : memref<1x128xf32, #tpu.memory_space<vmem>>, vector<1x128xf32>
    %23 = vector.broadcast %22 : vector<1x128xf32> to vector<8x128xf32>
    %24 = arith.mulf %12, %23 : vector<8x128xf32>
    %25 = arith.addf %21, %24 : vector<8x128xf32>
    %26 = math.tanh %25 : vector<8x128xf32>
    %27 = arith.mulf %20, %26 : vector<8x128xf32>
    %28 = arith.truncf %27 : vector<8x128xf32> to vector<8x128xbf16>
    %c0_10 = arith.constant 0 : index
    %c0_11 = arith.constant 0 : index
    %29 = vector.load %arg5[%c0_10, %c0_11] : memref<128x128xbf16, #tpu.memory_space<vmem>>, vector<128x128xbf16>
    %cst_12 = arith.constant dense<0.000000e+00> : vector<8x128xf32>
    %30 = tpu.matmul %28, %29, %cst_12 {dimension_numbers = #tpu.dot_dimension_numbers<[1], [0], [0], [1], [0, 0, 1, 1], [], []>} : vector<8x128xbf16>, vector<128x128xbf16>, vector<8x128xf32> -> vector<8x128xf32>
    %c0_13 = arith.constant 0 : index
    %c0_14 = arith.constant 0 : index
    %31 = vector.load %arg6[%c0_13, %c0_14] : memref<1x128xf32, #tpu.memory_space<vmem>>, vector<1x128xf32>
    %32 = vector.broadcast %31 : vector<1x128xf32> to vector<8x128xf32>
    %33 = arith.addf %30, %32 : vector<8x128xf32>
    %34 = math.tanh %33 : vector<8x128xf32>
    %35 = arith.truncf %34 : vector<8x128xf32> to vector<8x128xbf16>
    %c0_15 = arith.constant 0 : index
    %c0_16 = arith.constant 0 : index
    %36 = vector.load %arg7[%c0_15, %c0_16] : memref<8x128xbf16, #tpu.memory_space<vmem>>, vector<8x128xbf16>
    tpu.vector_store %arg7[%c0_15, %c0_16], %35 {strides = array<i32>} : memref<8x128xbf16, #tpu.memory_space<vmem>>, vector<8x128xbf16>,
    return
  }
  func.func @transform_0(%arg0: i32) -> (i32, i32) {
    %c0_i32 = arith.constant 0 : i32
    %c0_i32_0 = arith.constant 0 : i32
    return %arg0, %c0_i32 : i32, i32
  }
  func.func @transform_1(%arg0: i32) -> (i32, i32) {
    %c0_i32 = arith.constant 0 : i32
    %c0_i32_0 = arith.constant 0 : i32
    %c0_i32_1 = arith.constant 0 : i32
    return %c0_i32, %c0_i32_0 : i32, i32
  }
  func.func @transform_2(%arg0: i32) -> (i32, i32) {
    %c0_i32 = arith.constant 0 : i32
    %c0_i32_0 = arith.constant 0 : i32
    %c0_i32_1 = arith.constant 0 : i32
    return %c0_i32, %c0_i32_0 : i32, i32
  }
  func.func @transform_3(%arg0: i32) -> (i32, i32) {
    %c0_i32 = arith.constant 0 : i32
    %c0_i32_0 = arith.constant 0 : i32
    %c0_i32_1 = arith.constant 0 : i32
    return %c0_i32, %c0_i32_0 : i32, i32
  }
  func.func @transform_4(%arg0: i32) -> (i32, i32) {
    %c0_i32 = arith.constant 0 : i32
    %c0_i32_0 = arith.constant 0 : i32
    %c0_i32_1 = arith.constant 0 : i32
    return %c0_i32, %c0_i32_0 : i32, i32
  }
  func.func @transform_5(%arg0: i32) -> (i32, i32) {
    %c0_i32 = arith.constant 0 : i32
    %c0_i32_0 = arith.constant 0 : i32
    %c0_i32_1 = arith.constant 0 : i32
    return %c0_i32, %c0_i32_0 : i32, i32
  }
  func.func @transform_6(%arg0: i32) -> (i32, i32) {
    %c0_i32 = arith.constant 0 : i32
    %c0_i32_0 = arith.constant 0 : i32
    return %arg0, %c0_i32 : i32, i32
  }
}

</mosaic_0001>

<llo_original>
// kernel: tpu_custom_call.1
$region0: #{tpu_custom_call.1}
  #allocation0 [shape = 'u32[]', space=smem, size = 0x4, offset = 0x4, fixed_abs, tag = 'smem constant byte address 0x4 - core index']
  #allocation1 [shape = 'u32[144,128]{1,0:T(1,128)}', space=vmem, size = 0x12000, scoped, tag = 'internal scratch']
  %s0 = inlined_call_operand.hbm [shape: f32[4,16], index: 0, kind: input, shape index: {}]
  %s1 = inlined_call_operand.hbm [shape: bf16[16,384], index: 1, kind: input, shape index: {}]
  %s2 = inlined_call_operand.vmem [shape: f32[1,384], index: 2, kind: input, shape index: {}]
  %s3 = inlined_call_operand.vmem [shape: f32[1,128], index: 3, kind: input, shape index: {}]
  %s4 = inlined_call_operand.hbm [shape: bf16[128,128], index: 4, kind: input, shape index: {}]
  %s5 = inlined_call_operand.vmem [shape: f32[1,128], index: 5, kind: input, shape index: {}]
  %s6 = inlined_call_operand.hbm [shape: bf16[4,128], index: 6, kind: output, shape index: {}]
  %s7 = sld [smem:[#allocation0]]
  $region46: #{tpu_custom_call.1} parent=0
    _
  %s9 = ssub.s32 1, %s7
  %s10 = scalar_select 0, %s9, %s7
  $region1: #{tpu_custom_call.1} parent=0
    #allocation2 [shape = 'u8[4096]{0}', space=vmem, size = 0x1000, scoped, tag = 'input window, operand 0, single buffered']
    #allocation3 [shape = 's32[1]{0}', space=sflag, size = 0x4, scoped, tag = 'scoped memory for tpu_custom_call.1']
    #allocation4 [shape = 's32[1]{0}', space=sflag, size = 0x4, scoped, tag = 'scoped memory for tpu_custom_call.1']
    #allocation5 [shape = 'u8[12288]{0}', space=vmem, size = 0x3000, scoped, tag = 'input window, operand 1, single buffered']
    #allocation6 [shape = 's32[1]{0}', space=sflag, size = 0x4, scoped, tag = 'scoped memory for tpu_custom_call.1']
    #allocation7 [shape = 'u8[32768]{0}', space=vmem, size = 0x8000, scoped, tag = 'input window, operand 4, single buffered']
    #allocation8 [shape = 'u8[2048]{0}', space=vmem, size = 0x800, scoped, tag = 'output window, operand 0, single buffered']
    %11 = vsyncpa [#allocation3], 0
    %12 = vsyncpa [#allocation6], 0
    %13 = vsyncpa [#allocation4], 0
    // Predicated region
    $region2: #{tpu_custom_call.1} parent=1 // pred_check
      _
    $region3: #{tpu_custom_call.1} parent=1 // pred_check_branch
      %15 = sbr.rel (0) target = $region5
    $region4: #{tpu_custom_call.1} parent=1 // pred_region
      %s17 = ssub.s32 128, 64
      %18 = vsyncadd [#allocation3], %s17
      %s19 = sshll.u32 [#allocation2], 4
      %s20 = int_to_ptr.vmem [resolvable:$true] %s19
      %25 = dma.hbm_to_vmem [thread:$0]  %s0, 64, %s20, [#allocation3], 64, 64, 4
    $region5: #{tpu_custom_call.1} parent=1 // pred_fallthru
      _
    // Predicated region
    $region6: #{tpu_custom_call.1} parent=1 // pred_check
      _
    $region7: #{tpu_custom_call.1} parent=1 // pred_check_branch
      %27 = sbr.rel (0) target = $region9
    $region8: #{tpu_custom_call.1} parent=1 // pred_region
      %s29 = ssub.s32 384, 384
      %30 = vsyncadd [#allocation6], %s29
      %s31 = sshll.u32 [#allocation5], 4
      %s32 = int_to_ptr.vmem [resolvable:$true] %s31
      %37 = dma.hbm_to_vmem [thread:$0]  %s1, 384, %s32, [#allocation6], 192, 192, 12
    $region9: #{tpu_custom_call.1} parent=1 // pred_fallthru
      _
    // Predicated region
    $region10: #{tpu_custom_call.1} parent=1 // pred_check
      _
    $region11: #{tpu_custom_call.1} parent=1 // pred_check_branch
      %39 = sbr.rel (0) target = $region13
    $region12: #{tpu_custom_call.1} parent=1 // pred_region
      _
    $region13: #{tpu_custom_call.1} parent=1 // pred_fallthru
      _
    // Predicated region
    $region14: #{tpu_custom_call.1} parent=1 // pred_check
      _
    $region15: #{tpu_custom_call.1} parent=1 // pred_check_branch
      %41 = sbr.rel (0) target = $region17
    $region16: #{tpu_custom_call.1} parent=1 // pred_region
      _
    $region17: #{tpu_custom_call.1} parent=1 // pred_fallthru
      _
    // Predicated region
    $region18: #{tpu_custom_call.1} parent=1 // pred_check
      _
    $region19: #{tpu_custom_call.1} parent=1 // pred_check_branch
      %43 = sbr.rel (0) target = $region21
    $region20: #{tpu_custom_call.1} parent=1 // pred_region
      %s45 = ssub.s32 1024, 1024
      %46 = vsyncadd [#allocation6], %s45
      %s47 = sshll.u32 [#allocation7], 4
      %s48 = int_to_ptr.vmem [resolvable:$true] %s47
      %53 = dma.hbm_to_vmem [thread:$0]  %s4, 1024, %s48, [#allocation6], 64, 64, 4
    $region21: #{tpu_custom_call.1} parent=1 // pred_fallthru
      _
    // Predicated region
    $region22: #{tpu_custom_call.1} parent=1 // pred_check
      _
    $region23: #{tpu_custom_call.1} parent=1 // pred_check_branch
      %55 = sbr.rel (0) target = $region25
    $region24: #{tpu_custom_call.1} parent=1 // pred_region
      _
    $region25: #{tpu_custom_call.1} parent=1 // pred_fallthru
      _
    // Predicated region
    $region26: #{tpu_custom_call.1} parent=1 // pred_check
      _
    $region27: #{tpu_custom_call.1} parent=1 // pred_check_branch
      %57 = sbr.rel (0) target = $region29
    $region28: #{tpu_custom_call.1} parent=1 // pred_region
      %58 = dma.done [#allocation3], 128
    $region29: #{tpu_custom_call.1} parent=1 // pred_fallthru
      _
    // Predicated region
    $region30: #{tpu_custom_call.1} parent=1 // pred_check
      _
    $region31: #{tpu_custom_call.1} parent=1 // pred_check_branch
      %60 = sbr.rel (0) target = $region33
    $region32: #{tpu_custom_call.1} parent=1 // pred_region
      %61 = dma.done [#allocation6], 384
    $region33: #{tpu_custom_call.1} parent=1 // pred_fallthru
      _
    // Predicated region
    $region34: #{tpu_custom_call.1} parent=1 // pred_check
      _
    $region35: #{tpu_custom_call.1} parent=1 // pred_check_branch
      %63 = sbr.rel (0) target = $region37
    $region36: #{tpu_custom_call.1} parent=1 // pred_region
      %64 = dma.done [#allocation6], 1024
    $region37: #{tpu_custom_call.1} parent=1 // pred_fallthru
      _
    %v66 = vld [vmem:[#allocation2] sm:$0xff]
    %v67 = vpack.c.bf16 %v66, %v66
    %v68 = vld [vmem:[#allocation5] sm:$0xff]
    %v69 = vld [vmem:[#allocation5 + $0x8] sm:$0xf]
    %v70 = vld [vmem:[#allocation5 + $0xc] sm:$0xff]
    %v71 = vld [vmem:[#allocation5 + $0x14] sm:$0xf]
    %v72 = vld [vmem:[%s2] sm:$0x7]
    %v74 = vlaneseq
    %v75 = vshrl.u32 %v74, 7
    %v76 = vsub.s32 0, %v75
    %v77 = vrot.slane %v72, %v76
    %v78 = vlaneseq
    %v79 = vshrl.u32 %v78, 7
    %v80 = vsub.s32 1, %v79
    %v81 = vrot.slane %v72, %v80
    %v82 = vlaneseq
    %v83 = vshrl.u32 %v82, 7
    %v84 = vsub.s32 2, %v83
    %v85 = vrot.slane %v72, %v84
    %v93 = vunpack.c.l.b16 %v68
    %v94 = vunpack.c.h.b16 %v68
    %v95 = vunpack.c.l.b16 %v69
    %v96 = vunpack.c.l.b16 %v70
    %v97 = vunpack.c.h.b16 %v70
    %v98 = vunpack.c.l.b16 %v71
    %v99 = vpack.c.b16 %v96, %v93
    %v100 = vpack.c.b16 %v97, %v94
    %v101 = vpack.c.b16 %v98, %v95
    %vm105 = vcmask 130048
    %v107 = vsel %vm105, %v67, 0
    %109 = vmatprep.subr.bf16.mxu0 %v100
    %110 = vmatpush1.bf16.msra.mxu0 %v99
    %111 = vmatprep.subr.bf16.mxu0 0
    %112 = vmatpush1.bf16.msra.mxu0 0
    %113 = vmatprep.subr.bf16.mxu0 0
    %114 = vmatpush1.bf16.msra.mxu0 0
    %115 = vmatprep.subr.bf16.mxu0 0
    %116 = vmatpush1.bf16.msra.mxu0 0
    %117 = vmatprep.subr.bf16.mxu0 0
    %118 = vmatpush1.bf16.msra.mxu0 0
    %119 = vmatprep.subr.bf16.mxu0 0
    %120 = vmatpush1.bf16.msra.mxu0 0
    %121 = vmatprep.subr.bf16.mxu0 0
    %122 = vmatpush1.bf16.msra.mxu0 0
    %123 = vmatprep.subr.bf16.mxu0 0
    %124 = vmatpush1.bf16.msra.mxu0 0
    %125 = vmatprep.subr.bf16.mxu0 0
    %126 = vmatpush1.bf16.msra.mxu0 0
    %127 = vmatprep.subr.bf16.mxu0 0
    %128 = vmatpush1.bf16.msra.mxu0 0
    %129 = vmatprep.subr.bf16.mxu0 0
    %130 = vmatpush1.bf16.msra.mxu0 0
    %131 = vmatprep.subr.bf16.mxu0 0
    %132 = vmatpush1.bf16.msra.mxu0 0
    %133 = vmatprep.subr.bf16.mxu0 0
    %134 = vmatpush1.bf16.msra.mxu0 0
    %135 = vmatprep.subr.bf16.mxu0 0
    %136 = vmatpush1.bf16.msra.mxu0 0
    %137 = vmatprep.subr.bf16.mxu0 0
    %138 = vmatpush1.bf16.msra.mxu0 0
    %139 = vmatprep.subr.bf16.mxu0 0
    %140 = vmatpush1.bf16.msra.mxu0 0
    %141 = vmatprep.mubr.bf16.mxu0 0
    %142 = vmatmul.mubr.bf16.gmra.mrb[0].mxu0 %v107
    %v143 = vpop.f32.mrb[0].mxu0
    %v144 = vadd.f32 %v77, %v143
    %v145 = vpop.f32.mrb[0].mxu0
    %v146 = vadd.f32 %v81, %v145
    %v147 = vpop.f32.mrb[0].mxu0
    %v148 = vpop.f32.mrb[0].mxu0
    %149 = vdwg.mxu0
    %150 = vmatprep.subr.bf16.mxu0 0
    %151 = vmatpush1.bf16.msra.mxu0 %v101
    %152 = vmatprep.subr.bf16.mxu0 0
    %153 = vmatpush1.bf16.msra.mxu0 0
    %154 = vmatprep.subr.bf16.mxu0 0
    %155 = vmatpush1.bf16.msra.mxu0 0
    %156 = vmatprep.subr.bf16.mxu0 0
    %157 = vmatpush1.bf16.msra.mxu0 0
    %158 = vmatprep.subr.bf16.mxu0 0
    %159 = vmatpush1.bf16.msra.mxu0 0
    %160 = vmatprep.subr.bf16.mxu0 0
    %161 = vmatpush1.bf16.msra.mxu0 0
    %162 = vmatprep.subr.bf16.mxu0 0
    %163 = vmatpush1.bf16.msra.mxu0 0
    %164 = vmatprep.subr.bf16.mxu0 0
    %165 = vmatpush1.bf16.msra.mxu0 0
    %166 = vmatprep.subr.bf16.mxu0 0
    %167 = vmatpush1.bf16.msra.mxu0 0
    %168 = vmatprep.subr.bf16.mxu0 0
    %169 = vmatpush1.bf16.msra.mxu0 0
    %170 = vmatprep.subr.bf16.mxu0 0
    %171 = vmatpush1.bf16.msra.mxu0 0
    %172 = vmatprep.subr.bf16.mxu0 0
    %173 = vmatpush1.bf16.msra.mxu0 0
    %174 = vmatprep.subr.bf16.mxu0 0
    %175 = vmatpush1.bf16.msra.mxu0 0
    %176 = vmatprep.subr.bf16.mxu0 0
    %177 = vmatpush1.bf16.msra.mxu0 0
    %178 = vmatprep.subr.bf16.mxu0 0
    %179 = vmatpush1.bf16.msra.mxu0 0
    %180 = vmatprep.subr.bf16.mxu0 0
    %181 = vmatpush1.bf16.msra.mxu0 0
    %182 = vmatprep.mubr.bf16.mxu0 0
    %183 = vmatmul.mubr.bf16.gmra.mrb[0].mxu0 %v107
    %v184 = vpop.f32.mrb[0].mxu0
    %v185 = vadd.f32 %v85, %v184
    %v186 = vpop.f32.mrb[0].mxu0
    %v187 = vpop.f32.mrb[0].mxu0
    %v188 = vpop.f32.mrb[0].mxu0
    %189 = vdwg.mxu0
    %v190 = vxor.u32 %v144, 2147483648
    %v191 = vmul.f32 %v190, 1.442695
    %v192 = vpow.pop %v191
    %v193 = vadd.f32 %v192, 1.0
    %v194 = vrcp.pop %v193
    %v195 = vmul.f32 1.0, %v194
    %v196 = vsub.f32 0.0, %v146
    %v197 = vxor.u32 %v196, 2147483648
    %v198 = vmul.f32 %v197, 1.442695
    %v199 = vpow.pop %v198
    %v200 = vadd.f32 %v199, 1.0
    %v201 = vrcp.pop %v200
    %v202 = vmul.f32 1.0, %v201
    %v203 = vld [vmem:[%s3] sm:$0x1]
    %v205 = vlaneseq
    %v206 = vshrl.u32 %v205, 7
    %v207 = vsub.s32 0, %v206
    %v208 = vrot.slane %v203, %v207
    %v210 = vmul.f32 %v195, %v208
    %v211 = vadd.f32 %v185, %v210
    %v212 = vtanh.pop %v211
    %v213 = vmul.f32 %v202, %v212
    %v214 = vpack.c.bf16 %v213, %v213
    %v215 = vld [vmem:[#allocation7] sm:$0xf]
    %v216 = vld [vmem:[#allocation7 + $0x4] sm:$0xf]
    %v217 = vld [vmem:[#allocation7 + $0x8] sm:$0xf]
    %v218 = vld [vmem:[#allocation7 + $0xc] sm:$0xf]
    %v219 = vld [vmem:[#allocation7 + $0x10] sm:$0xf]
    %v220 = vld [vmem:[#allocation7 + $0x14] sm:$0xf]
    %v221 = vld [vmem:[#allocation7 + $0x18] sm:$0xf]
    %v222 = vld [vmem:[#allocation7 + $0x1c] sm:$0xf]
    %v223 = vld [vmem:[#allocation7 + $0x20] sm:$0xf]
    %v224 = vld [vmem:[#allocation7 + $0x24] sm:$0xf]
    %v225 = vld [vmem:[#allocation7 + $0x28] sm:$0xf]
    %v226 = vld [vmem:[#allocation7 + $0x2c] sm:$0xf]
    %v227 = vld [vmem:[#allocation7 + $0x30] sm:$0xf]
    %v228 = vld [vmem:[#allocation7 + $0x34] sm:$0xf]
    %v229 = vld [vmem:[#allocation7 + $0x38] sm:$0xf]
    %v230 = vld [vmem:[#allocation7 + $0x3c] sm:$0xf]
    %v231 = vld [vmem:[%s5] sm:$0x1]
    %v233 = vlaneseq
    %v234 = vshrl.u32 %v233, 7
    %v235 = vsub.s32 0, %v234
    %v236 = vrot.slane %v231, %v235
    %v254 = vunpack.c.l.b16 %v215
    %v255 = vunpack.c.l.b16 %v216
    %v256 = vunpack.c.l.b16 %v217
    %v257 = vunpack.c.l.b16 %v218
    %v258 = vunpack.c.l.b16 %v219
    %v259 = vunpack.c.l.b16 %v220
    %v260 = vunpack.c.l.b16 %v221
    %v261 = vunpack.c.l.b16 %v222
    %v262 = vunpack.c.l.b16 %v223
    %v263 = vunpack.c.l.b16 %v224
    %v264 = vunpack.c.l.b16 %v225
    %v265 = vunpack.c.l.b16 %v226
    %v266 = vunpack.c.l.b16 %v227
    %v267 = vunpack.c.l.b16 %v228
    %v268 = vunpack.c.l.b16 %v229
    %v269 = vunpack.c.l.b16 %v230
    %v270 = vpack.c.b16 %v255, %v254
    %v271 = vpack.c.b16 %v257, %v256
    %v272 = vpack.c.b16 %v259, %v258
    %v273 = vpack.c.b16 %v261, %v260
    %v274 = vpack.c.b16 %v263, %v262
    %v275 = vpack.c.b16 %v265, %v264
    %v276 = vpack.c.b16 %v267, %v266
    %v277 = vpack.c.b16 %v269, %v268
    %286 = vmatprep.subr.bf16.mxu0 0
    %287 = vmatpush1.bf16.msra.mxu0 %v270
    %288 = vmatprep.subr.bf16.mxu0 0
    %289 = vmatpush1.bf16.msra.mxu0 %v271
    %290 = vmatprep.subr.bf16.mxu0 0
    %291 = vmatpush1.bf16.msra.mxu0 %v272
    %292 = vmatprep.subr.bf16.mxu0 0
    %293 = vmatpush1.bf16.msra.mxu0 %v273
    %294 = vmatprep.subr.bf16.mxu0 0
    %295 = vmatpush1.bf16.msra.mxu0 %v274
    %296 = vmatprep.subr.bf16.mxu0 0
    %297 = vmatpush1.bf16.msra.mxu0 %v275
    %298 = vmatprep.subr.bf16.mxu0 0
    %299 = vmatpush1.bf16.msra.mxu0 %v276
    %300 = vmatprep.subr.bf16.mxu0 0
    %301 = vmatpush1.bf16.msra.mxu0 %v277
    %302 = vmatprep.subr.bf16.mxu0 0
    %303 = vmatpush1.bf16.msra.mxu0 0
    %304 = vmatprep.subr.bf16.mxu0 0
    %305 = vmatpush1.bf16.msra.mxu0 0
    %306 = vmatprep.subr.bf16.mxu0 0
    %307 = vmatpush1.bf16.msra.mxu0 0
    %308 = vmatprep.subr.bf16.mxu0 0
    %309 = vmatpush1.bf16.msra.mxu0 0
    %310 = vmatprep.subr.bf16.mxu0 0
    %311 = vmatpush1.bf16.msra.mxu0 0
    %312 = vmatprep.subr.bf16.mxu0 0
    %313 = vmatpush1.bf16.msra.mxu0 0
    %314 = vmatprep.subr.bf16.mxu0 0
    %315 = vmatpush1.bf16.msra.mxu0 0
    %316 = vmatprep.subr.bf16.mxu0 0
    %317 = vmatpush1.bf16.msra.mxu0 0
    %318 = vmatprep.mubr.bf16.mxu0 0
    %319 = vmatmul.mubr.bf16.gmra.mrb[0].mxu0 %v214
    %v320 = vpop.f32.mrb[0].mxu0
    %v321 = vadd.f32 %v236, %v320
    %v322 = vpop.f32.mrb[0].mxu0
    %v323 = vpop.f32.mrb[0].mxu0
    %v324 = vpop.f32.mrb[0].mxu0
    %325 = vdwg.mxu0
    %v326 = vtanh.pop %v321
    %v327 = vpack.c.bf16 %v326, %v326
    %v330 = vunpack.c.l.s4 1983009808
    %v331 = vunpack.c.0.s8 %v330
    %v332 = vlaneseq
    %v333 = vshrl.u32 %v332, 7
    %v334 = vsub.s32 %v331, %v333
    %v335 = vrot.slane %v327, %v334
    %v336 = vcombine.high %v335, %v335
    %339 = vst [vmem:[#allocation8] sm:$0x3] %v335
    %340 = vst [vmem:[#allocation8 + $0x2] sm:$0x3] %v336
    // Predicated region
    $region38: #{tpu_custom_call.1} parent=1 // pred_check
      _
    $region39: #{tpu_custom_call.1} parent=1 // pred_check_branch
      %342 = sbr.rel (0) target = $region41
    $region40: #{tpu_custom_call.1} parent=1 // pred_region
      %s344 = ssub.s32 64, 32
      %345 = vsyncadd [#allocation4], %s344
      %s346 = sshll.u32 [#allocation8], 4
      %s347 = int_to_ptr.vmem [resolvable:$true] %s346
      %352 = dma.vmem_to_hbm [thread:$0]  %s347, 32, %s6, [#allocation4], 32, 32, 2
    $region41: #{tpu_custom_call.1} parent=1 // pred_fallthru
      _
    // Predicated region
    $region42: #{tpu_custom_call.1} parent=1 // pred_check
      _
    $region43: #{tpu_custom_call.1} parent=1 // pred_check_branch
      %354 = sbr.rel (0) target = $region45
    $region44: #{tpu_custom_call.1} parent=1 // pred_region
      %355 = dma.done [#allocation4], 64
    $region45: #{tpu_custom_call.1} parent=1 // pred_fallthru
      _
    %356 = vsyncpa [#allocation3], 1
    %357 = vsyncpa [#allocation6], 1
    %358 = vsyncpa [#allocation4], 1

</llo_original>
